<compile_context>
chip_gen: v5e
topology: v5e:2x2
jax: 0.10.0
libtpu: 0.0.40
codegen_flags: <defaults>
</compile_context>

<pallas_src>
import functools

import numpy as np
import jax
import jax.numpy as jnp
from jax import lax
from jax.experimental import pallas as pl
from jax.experimental.pallas import tpu as pltpu


def _pick_th(total_h, w_sp, target_rows=1024, sublane=16, min_steps=2):
    """Pick a strip height th | total_h so the per-step row block R = th*w_sp
    is sublane-aligned (16 rows for bf16 packing, 8 as a fallback) and
    <= target_rows, preferring to keep >= min_steps grid steps so both v7x
    TensorCores get work."""
    divisors = [d for d in range(1, total_h + 1) if total_h % d == 0]
    for align in (sublane, 8):
        good = [d for d in divisors
                if (d * w_sp) % align == 0 and d * w_sp <= target_rows]
        if good:
            pref = [d for d in good if total_h // d >= min_steps]
            return max(pref) if pref else max(good)
    # Fallback: full-extent block (always a legal tiling).
    return total_h


def _expand_norm_shuffle_kernel(x_ref, w_ref, b_ref, g_ref, beta_ref, o_ref,
                                *, c, th, w_sp, eps):
    """Fused Linear(+bias) -> grouped LayerNorm -> pixel-shuffle slab store.

    x_ref    : (R, dim)         bf16 token rows of one row-strip (R = th * W)
    w_ref    : (dim, 4c)        bf16 expand weight, resident (constant index)
    b_ref    : (1, 4c)          f32 expand bias
    g_ref    : (1, c)           f32 LayerNorm gamma
    beta_ref : (1, c)           f32 LayerNorm beta
    o_ref    : (th, 2, W, 2c)   slab of the (B*H, 2, W, 2c) shuffled output
    """
    # Single bf16 matmul, f32 accumulation on the MXU.
    y = jnp.dot(x_ref[...], w_ref[...], preferred_element_type=jnp.float32)
    y = y + b_ref[...]                                    # (R, 4c), f32

    gamma = g_ref[...]                                    # (1, c)
    beta = beta_ref[...]                                  # (1, c)

    # Each contiguous c-wide column group of y is exactly the channel vector
    # of one rearranged token -> normalize per group and store the normalized
    # group straight into its lane slice of the output block (no lane concat).
    for p1 in range(2):
        for p2 in range(2):
            g = 2 * p1 + p2
            yg = y[:, g * c:(g + 1) * c]                  # (R, c), f32
            mu = jnp.mean(yg, axis=-1, keepdims=True)
            var = jnp.mean(jnp.square(yg - mu), axis=-1, keepdims=True)
            yn = (yg - mu) * lax.rsqrt(var + eps) * gamma + beta
            o_ref[:, p1:p1 + 1, :, p2 * c:(p2 + 1) * c] = (
                yn.reshape(th, 1, w_sp, c).astype(o_ref.dtype))


def patch_expand(x, params, eps=1e-5):
    """x: (B, L, dim) -> (B, 4L, dim // 2).
    params: w (dim, 2*dim) [pre-transposed, y = x @ w + b], b (2*dim,),
            gamma/beta (dim//2,)."""
    B, L, dim = x.shape
    H = int(round(np.sqrt(L)))
    W = H
    assert H * W == L, "PatchExpand assumes a square token grid"
    assert dim % 2 == 0
    c = dim // 2
    four_c = 2 * dim

    # bf16 matmul operands; everything in the LN epilogue stays f32.
    x2d = x.reshape(B * L, dim).astype(jnp.bfloat16)
    w_bf16 = params["w"].astype(jnp.bfloat16)                       # (dim, 4c)
    b = params["b"].astype(jnp.float32).reshape(1, four_c)
    gamma = params["gamma"].astype(jnp.float32).reshape(1, c)
    beta = params["beta"].astype(jnp.float32).reshape(1, c)

    total_h = B * H                     # batch folded into the row-strip axis
    th = _pick_th(total_h, W)
    R = th * W                          # token rows per grid step
    n_steps = total_h // th

    kernel = functools.partial(_expand_norm_shuffle_kernel,
                               c=c, th=th, w_sp=W, eps=eps)

    out5 = pl.pallas_call(
        kernel,
        out_shape=jax.ShapeDtypeStruct((total_h, 2, W, dim), x.dtype),
        grid=(n_steps,),
        in_specs=[
            pl.BlockSpec((R, dim), lambda i: (i, 0)),
            pl.BlockSpec((dim, four_c), lambda i: (0, 0)),   # resident weight
            pl.BlockSpec((1, four_c), lambda i: (0, 0)),     # resident bias
            pl.BlockSpec((1, c), lambda i: (0, 0)),          # resident gamma
            pl.BlockSpec((1, c), lambda i: (0, 0)),          # resident beta
        ],
        out_specs=pl.BlockSpec((th, 2, W, dim), lambda i: (i, 0, 0, 0)),
        compiler_params=pltpu.CompilerParams(
            dimension_semantics=("parallel",),
            vmem_limit_bytes=48 * 1024 * 1024),
    )(x2d, w_bf16, b, gamma, beta)

    # (B*H, 2, W, 2c) -> (B, 4L, c): contiguous row-major, metadata-only.
    return out5.reshape(B, 4 * L, c)


# ----------------------------------------------------------------------------
# pure-JAX reference for the numerical check (mirrors the kernel's bf16 MXU
# path so the tolerance can stay tight).
# ----------------------------------------------------------------------------
def _reference(x, params, eps=1e-5):
    B, L, dim = x.shape
    H = int(round(np.sqrt(L)))
    W = H
    c = dim // 2
    y = jnp.dot(x.astype(jnp.bfloat16), params["w"].astype(jnp.bfloat16),
                preferred_element_type=jnp.float32) + params["b"]
    y = y.reshape(B, H, W, 2, 2, c)                   # b h w p1 p2 c
    y = jnp.transpose(y, (0, 1, 3, 2, 4, 5))          # b h p1 w p2 c
    y = y.reshape(B, 4 * L, c)
    m = jnp.mean(y, axis=-1, keepdims=True)
    v = jnp.mean(jnp.square(y - m), axis=-1, keepdims=True)
    return (y - m) * lax.rsqrt(v + eps) * params["gamma"] + params["beta"]


# ----------------------------------------------------------------------------
# main
# ----------------------------------------------------------------------------
if __name__ == "__main__":
    B, H, W, dim = 2, 8, 8, 64
    L = H * W
    c = dim // 2

    key = jax.random.PRNGKey(0)
    kx, kw, kb, kg, kbeta = jax.random.split(key, 5)

    x = jax.random.normal(kx, (B, L, dim), dtype=jnp.float32)
    params = {
        # nn.Linear(dim, 2*dim) stored pre-transposed: y = x @ w + b
        "w": jax.random.normal(kw, (dim, 2 * dim), dtype=jnp.float32)
             * np.float32(1.0 / np.sqrt(dim)),
        "b": 0.1 * jax.random.normal(kb, (2 * dim,), dtype=jnp.float32),
        "gamma": 1.0 + 0.1 * jax.random.normal(kg, (c,), dtype=jnp.float32),
        "beta": 0.1 * jax.random.normal(kbeta, (c,), dtype=jnp.float32),
    }

    fwd = jax.jit(patch_expand)
    out = jax.block_until_ready(fwd(x, params))
    assert out.shape == (B, 4 * L, c), out.shape

    ref = jax.block_until_ready(_reference(x, params))
    np.testing.assert_allclose(np.asarray(out), np.asarray(ref),
                               rtol=5e-3, atol=5e-3)

    print("KERNEL_OK")
</pallas_src>

<mosaic_0001>
module attributes {stable_mosaic.version = 11 : i64} {
  func.func @_expand_norm_shuffle_kernel(%arg0: i32, %arg1: memref<64x64xbf16, #tpu.memory_space<vmem>>, %arg2: memref<64x128xbf16, #tpu.memory_space<vmem>>, %arg3: memref<1x128xf32, #tpu.memory_space<vmem>>, %arg4: memref<1x32xf32, #tpu.memory_space<vmem>>, %arg5: memref<1x32xf32, #tpu.memory_space<vmem>>, %arg6: memref<8x2x8x64xf32, #tpu.memory_space<vmem>>) attributes {dimension_semantics = [#tpu.dimension_semantics<parallel>], iteration_bounds = array<i64: 2>, scalar_prefetch = 0 : i64, scratch_operands = 0 : i64, tpu.core_type = #tpu.core_type<tc>, window_params = [{transform_indices = @transform_0, window_bounds = array<i64: 64, 64>}, {pipeline_mode = #tpu.pipeline_mode<synchronous>, transform_indices = @transform_1, window_bounds = array<i64: 64, 128>}, {pipeline_mode = #tpu.pipeline_mode<synchronous>, transform_indices = @transform_2, window_bounds = array<i64: 1, 128>}, {pipeline_mode = #tpu.pipeline_mode<synchronous>, transform_indices = @transform_3, window_bounds = array<i64: 1, 32>}, {pipeline_mode = #tpu.pipeline_mode<synchronous>, transform_indices = @transform_4, window_bounds = array<i64: 1, 32>}, {transform_indices = @transform_5, window_bounds = array<i64: 8, 2, 8, 64>}]} {
    %c0 = arith.constant 0 : index
    %c0_0 = arith.constant 0 : index
    %0 = vector.load %arg1[%c0, %c0_0] : memref<64x64xbf16, #tpu.memory_space<vmem>>, vector<64x64xbf16>
    %c0_1 = arith.constant 0 : index
    %c0_2 = arith.constant 0 : index
    %1 = vector.load %arg2[%c0_1, %c0_2] : memref<64x128xbf16, #tpu.memory_space<vmem>>, vector<64x128xbf16>
    %cst = arith.constant dense<0.000000e+00> : vector<64x128xf32>
    %2 = tpu.matmul %0, %1, %cst {dimension_numbers = #tpu.dot_dimension_numbers<[1], [0], [0], [1], [0, 0, 1, 1], [], []>} : vector<64x64xbf16>, vector<64x128xbf16>, vector<64x128xf32> -> vector<64x128xf32>
    %c0_3 = arith.constant 0 : index
    %c0_4 = arith.constant 0 : index
    %3 = vector.load %arg3[%c0_3, %c0_4] : memref<1x128xf32, #tpu.memory_space<vmem>>, vector<1x128xf32>
    %4 = vector.broadcast %3 : vector<1x128xf32> to vector<64x128xf32>
    %5 = arith.addf %2, %4 : vector<64x128xf32>
    %c0_5 = arith.constant 0 : index
    %c0_6 = arith.constant 0 : index
    %6 = vector.load %arg4[%c0_5, %c0_6] : memref<1x32xf32, #tpu.memory_space<vmem>>, vector<1x32xf32>
    %c0_7 = arith.constant 0 : index
    %c0_8 = arith.constant 0 : index
    %7 = vector.load %arg5[%c0_7, %c0_8] : memref<1x32xf32, #tpu.memory_space<vmem>>, vector<1x32xf32>
    %8 = vector.extract_strided_slice %5 {offsets = [0, 0], sizes = [64, 32], strides = [1, 1]} : vector<64x128xf32> to vector<64x32xf32>
    %cst_9 = arith.constant dense<0.000000e+00> : vector<64xf32>
    %9 = vector.multi_reduction <add>, %8, %cst_9 [1] : vector<64x32xf32> to vector<64xf32>
    %10 = vector.shape_cast %9 : vector<64xf32> to vector<64x1xf32>
    %cst_10 = arith.constant 3.200000e+01 : f32
    %11 = vector.broadcast %cst_10 : f32 to vector<64x1xf32>
    %12 = arith.divf %10, %11 : vector<64x1xf32>
    %13 = vector.broadcast %12 : vector<64x1xf32> to vector<64x32xf32>
    %14 = arith.subf %8, %13 : vector<64x32xf32>
    %15 = arith.mulf %14, %14 : vector<64x32xf32>
    %cst_11 = arith.constant dense<0.000000e+00> : vector<64xf32>
    %16 = vector.multi_reduction <add>, %15, %cst_11 [1] : vector<64x32xf32> to vector<64xf32>
    %17 = vector.shape_cast %16 : vector<64xf32> to vector<64x1xf32>
    %cst_12 = arith.constant 3.200000e+01 : f32
    %18 = vector.broadcast %cst_12 : f32 to vector<64x1xf32>
    %19 = arith.divf %17, %18 : vector<64x1xf32>
    %20 = vector.broadcast %12 : vector<64x1xf32> to vector<64x32xf32>
    %21 = arith.subf %8, %20 : vector<64x32xf32>
    %cst_13 = arith.constant 9.99999974E-6 : f32
    %22 = vector.broadcast %cst_13 : f32 to vector<64x1xf32>
    %23 = arith.addf %19, %22 : vector<64x1xf32>
    %24 = math.rsqrt %23 : vector<64x1xf32>
    %25 = vector.broadcast %24 : vector<64x1xf32> to vector<64x32xf32>
    %26 = arith.mulf %21, %25 : vector<64x32xf32>
    %27 = vector.broadcast %6 : vector<1x32xf32> to vector<64x32xf32>
    %28 = arith.mulf %26, %27 : vector<64x32xf32>
    %29 = vector.broadcast %7 : vector<1x32xf32> to vector<64x32xf32>
    %30 = arith.addf %28, %29 : vector<64x32xf32>
    %31 = vector.shape_cast %30 : vector<64x32xf32> to vector<8x1x8x32xf32>
    %c0_14 = arith.constant 0 : index
    %c0_15 = arith.constant 0 : index
    %c0_16 = arith.constant 0 : index
    %c0_17 = arith.constant 0 : index
    %32 = vector.load %arg6[%c0_14, %c0_15, %c0_16, %c0_17] : memref<8x2x8x64xf32, #tpu.memory_space<vmem>>, vector<8x1x8x32xf32>
    tpu.vector_store %arg6[%c0_14, %c0_15, %c0_16, %c0_17], %31 {strides = array<i32>} : memref<8x2x8x64xf32, #tpu.memory_space<vmem>>, vector<8x1x8x32xf32>,
    %33 = vector.extract_strided_slice %5 {offsets = [0, 32], sizes = [64, 32], strides = [1, 1]} : vector<64x128xf32> to vector<64x32xf32>
    %cst_18 = arith.constant dense<0.000000e+00> : vector<64xf32>
    %34 = vector.multi_reduction <add>, %33, %cst_18 [1] : vector<64x32xf32> to vector<64xf32>
    %35 = vector.shape_cast %34 : vector<64xf32> to vector<64x1xf32>
    %cst_19 = arith.constant 3.200000e+01 : f32
    %36 = vector.broadcast %cst_19 : f32 to vector<64x1xf32>
    %37 = arith.divf %35, %36 : vector<64x1xf32>
    %38 = vector.broadcast %37 : vector<64x1xf32> to vector<64x32xf32>
    %39 = arith.subf %33, %38 : vector<64x32xf32>
    %40 = arith.mulf %39, %39 : vector<64x32xf32>
    %cst_20 = arith.constant dense<0.000000e+00> : vector<64xf32>
    %41 = vector.multi_reduction <add>, %40, %cst_20 [1] : vector<64x32xf32> to vector<64xf32>
    %42 = vector.shape_cast %41 : vector<64xf32> to vector<64x1xf32>
    %cst_21 = arith.constant 3.200000e+01 : f32
    %43 = vector.broadcast %cst_21 : f32 to vector<64x1xf32>
    %44 = arith.divf %42, %43 : vector<64x1xf32>
    %45 = vector.broadcast %37 : vector<64x1xf32> to vector<64x32xf32>
    %46 = arith.subf %33, %45 : vector<64x32xf32>
    %cst_22 = arith.constant 9.99999974E-6 : f32
    %47 = vector.broadcast %cst_22 : f32 to vector<64x1xf32>
    %48 = arith.addf %44, %47 : vector<64x1xf32>
    %49 = math.rsqrt %48 : vector<64x1xf32>
    %50 = vector.broadcast %49 : vector<64x1xf32> to vector<64x32xf32>
    %51 = arith.mulf %46, %50 : vector<64x32xf32>
    %52 = vector.broadcast %6 : vector<1x32xf32> to vector<64x32xf32>
    %53 = arith.mulf %51, %52 : vector<64x32xf32>
    %54 = vector.broadcast %7 : vector<1x32xf32> to vector<64x32xf32>
    %55 = arith.addf %53, %54 : vector<64x32xf32>
    %56 = vector.shape_cast %55 : vector<64x32xf32> to vector<8x1x8x32xf32>
    %c0_23 = arith.constant 0 : index
    %c0_24 = arith.constant 0 : index
    %c0_25 = arith.constant 0 : index
    %c32 = arith.constant 32 : index
    %57 = vector.load %arg6[%c0_23, %c0_24, %c0_25, %c32] : memref<8x2x8x64xf32, #tpu.memory_space<vmem>>, vector<8x1x8x32xf32>
    tpu.vector_store %arg6[%c0_23, %c0_24, %c0_25, %c32], %56 {strides = array<i32>} : memref<8x2x8x64xf32, #tpu.memory_space<vmem>>, vector<8x1x8x32xf32>,
    %58 = vector.extract_strided_slice %5 {offsets = [0, 64], sizes = [64, 32], strides = [1, 1]} : vector<64x128xf32> to vector<64x32xf32>
    %cst_26 = arith.constant dense<0.000000e+00> : vector<64xf32>
    %59 = vector.multi_reduction <add>, %58, %cst_26 [1] : vector<64x32xf32> to vector<64xf32>
    %60 = vector.shape_cast %59 : vector<64xf32> to vector<64x1xf32>
    %cst_27 = arith.constant 3.200000e+01 : f32
    %61 = vector.broadcast %cst_27 : f32 to vector<64x1xf32>
    %62 = arith.divf %60, %61 : vector<64x1xf32>
    %63 = vector.broadcast %62 : vector<64x1xf32> to vector<64x32xf32>
    %64 = arith.subf %58, %63 : vector<64x32xf32>
    %65 = arith.mulf %64, %64 : vector<64x32xf32>
    %cst_28 = arith.constant dense<0.000000e+00> : vector<64xf32>
    %66 = vector.multi_reduction <add>, %65, %cst_28 [1] : vector<64x32xf32> to vector<64xf32>
    %67 = vector.shape_cast %66 : vector<64xf32> to vector<64x1xf32>
    %cst_29 = arith.constant 3.200000e+01 : f32
    %68 = vector.broadcast %cst_29 : f32 to vector<64x1xf32>
    %69 = arith.divf %67, %68 : vector<64x1xf32>
    %70 = vector.broadcast %62 : vector<64x1xf32> to vector<64x32xf32>
    %71 = arith.subf %58, %70 : vector<64x32xf32>
    %cst_30 = arith.constant 9.99999974E-6 : f32
    %72 = vector.broadcast %cst_30 : f32 to vector<64x1xf32>
    %73 = arith.addf %69, %72 : vector<64x1xf32>
    %74 = math.rsqrt %73 : vector<64x1xf32>
    %75 = vector.broadcast %74 : vector<64x1xf32> to vector<64x32xf32>
    %76 = arith.mulf %71, %75 : vector<64x32xf32>
    %77 = vector.broadcast %6 : vector<1x32xf32> to vector<64x32xf32>
    %78 = arith.mulf %76, %77 : vector<64x32xf32>
    %79 = vector.broadcast %7 : vector<1x32xf32> to vector<64x32xf32>
    %80 = arith.addf %78, %79 : vector<64x32xf32>
    %81 = vector.shape_cast %80 : vector<64x32xf32> to vector<8x1x8x32xf32>
    %c0_31 = arith.constant 0 : index
    %c1 = arith.constant 1 : index
    %c0_32 = arith.constant 0 : index
    %c0_33 = arith.constant 0 : index
    %82 = vector.load %arg6[%c0_31, %c1, %c0_32, %c0_33] : memref<8x2x8x64xf32, #tpu.memory_space<vmem>>, vector<8x1x8x32xf32>
    tpu.vector_store %arg6[%c0_31, %c1, %c0_32, %c0_33], %81 {strides = array<i32>} : memref<8x2x8x64xf32, #tpu.memory_space<vmem>>, vector<8x1x8x32xf32>,
    %83 = vector.extract_strided_slice %5 {offsets = [0, 96], sizes = [64, 32], strides = [1, 1]} : vector<64x128xf32> to vector<64x32xf32>
    %cst_34 = arith.constant dense<0.000000e+00> : vector<64xf32>
    %84 = vector.multi_reduction <add>, %83, %cst_34 [1] : vector<64x32xf32> to vector<64xf32>
    %85 = vector.shape_cast %84 : vector<64xf32> to vector<64x1xf32>
    %cst_35 = arith.constant 3.200000e+01 : f32
    %86 = vector.broadcast %cst_35 : f32 to vector<64x1xf32>
    %87 = arith.divf %85, %86 : vector<64x1xf32>
    %88 = vector.broadcast %87 : vector<64x1xf32> to vector<64x32xf32>
    %89 = arith.subf %83, %88 : vector<64x32xf32>
    %90 = arith.mulf %89, %89 : vector<64x32xf32>
    %cst_36 = arith.constant dense<0.000000e+00> : vector<64xf32>
    %91 = vector.multi_reduction <add>, %90, %cst_36 [1] : vector<64x32xf32> to vector<64xf32>
    %92 = vector.shape_cast %91 : vector<64xf32> to vector<64x1xf32>
    %cst_37 = arith.constant 3.200000e+01 : f32
    %93 = vector.broadcast %cst_37 : f32 to vector<64x1xf32>
    %94 = arith.divf %92, %93 : vector<64x1xf32>
    %95 = vector.broadcast %87 : vector<64x1xf32> to vector<64x32xf32>
    %96 = arith.subf %83, %95 : vector<64x32xf32>
    %cst_38 = arith.constant 9.99999974E-6 : f32
    %97 = vector.broadcast %cst_38 : f32 to vector<64x1xf32>
    %98 = arith.addf %94, %97 : vector<64x1xf32>
    %99 = math.rsqrt %98 : vector<64x1xf32>
    %100 = vector.broadcast %99 : vector<64x1xf32> to vector<64x32xf32>
    %101 = arith.mulf %96, %100 : vector<64x32xf32>
    %102 = vector.broadcast %6 : vector<1x32xf32> to vector<64x32xf32>
    %103 = arith.mulf %101, %102 : vector<64x32xf32>
    %104 = vector.broadcast %7 : vector<1x32xf32> to vector<64x32xf32>
    %105 = arith.addf %103, %104 : vector<64x32xf32>
    %106 = vector.shape_cast %105 : vector<64x32xf32> to vector<8x1x8x32xf32>
    %c0_39 = arith.constant 0 : index
    %c1_40 = arith.constant 1 : index
    %c0_41 = arith.constant 0 : index
    %c32_42 = arith.constant 32 : index
    %107 = vector.load %arg6[%c0_39, %c1_40, %c0_41, %c32_42] : memref<8x2x8x64xf32, #tpu.memory_space<vmem>>, vector<8x1x8x32xf32>
    tpu.vector_store %arg6[%c0_39, %c1_40, %c0_41, %c32_42], %106 {strides = array<i32>} : memref<8x2x8x64xf32, #tpu.memory_space<vmem>>, vector<8x1x8x32xf32>,
    return
  }
  func.func @transform_0(%arg0: i32) -> (i32, i32) {
    %c0_i32 = arith.constant 0 : i32
    %c0_i32_0 = arith.constant 0 : i32
    return %arg0, %c0_i32 : i32, i32
  }
  func.func @transform_1(%arg0: i32) -> (i32, i32) {
    %c0_i32 = arith.constant 0 : i32
    %c0_i32_0 = arith.constant 0 : i32
    %c0_i32_1 = arith.constant 0 : i32
    return %c0_i32, %c0_i32_0 : i32, i32
  }
  func.func @transform_2(%arg0: i32) -> (i32, i32) {
    %c0_i32 = arith.constant 0 : i32
    %c0_i32_0 = arith.constant 0 : i32
    %c0_i32_1 = arith.constant 0 : i32
    return %c0_i32, %c0_i32_0 : i32, i32
  }
  func.func @transform_3(%arg0: i32) -> (i32, i32) {
    %c0_i32 = arith.constant 0 : i32
    %c0_i32_0 = arith.constant 0 : i32
    %c0_i32_1 = arith.constant 0 : i32
    return %c0_i32, %c0_i32_0 : i32, i32
  }
  func.func @transform_4(%arg0: i32) -> (i32, i32) {
    %c0_i32 = arith.constant 0 : i32
    %c0_i32_0 = arith.constant 0 : i32
    %c0_i32_1 = arith.constant 0 : i32
    return %c0_i32, %c0_i32_0 : i32, i32
  }
  func.func @transform_5(%arg0: i32) -> (i32, i32, i32, i32) {
    %c0_i32 = arith.constant 0 : i32
    %c0_i32_0 = arith.constant 0 : i32
    %c0_i32_1 = arith.constant 0 : i32
    %c0_i32_2 = arith.constant 0 : i32
    return %arg0, %c0_i32, %c0_i32_0, %c0_i32_1 : i32, i32, i32, i32
  }
}

</mosaic_0001>

<llo_original>
// kernel: patch_expand.1
$region0: #{patch_expand.1}
  #allocation0 [shape = 'u32[]', space=smem, size = 0x4, offset = 0x4, fixed_abs, tag = 'smem constant byte address 0x4 - core index']
  #allocation1 [shape = 'u32[72,128]{1,0:T(1,128)}', space=vmem, size = 0x9000, scoped, tag = 'internal scratch']
  %s0 = inlined_call_operand.vmem [shape: bf16[128,64], index: 0, kind: input, shape index: {}]
  %s1 = inlined_call_operand.vmem [shape: bf16[64,128], index: 1, kind: input, shape index: {}]
  %s2 = inlined_call_operand.vmem [shape: f32[1,128], index: 2, kind: input, shape index: {}]
  %s3 = inlined_call_operand.vmem [shape: f32[1,32], index: 3, kind: input, shape index: {}]
  %s4 = inlined_call_operand.vmem [shape: f32[1,32], index: 4, kind: input, shape index: {}]
  %s5 = inlined_call_operand.vmem [shape: f32[16,2,8,64], index: 5, kind: output, shape index: {}]
  %s6 = sld [smem:[#allocation0]]
  $region53: #{patch_expand.1} parent=0
    _
  %s8 = ssub.s32 1, %s6
  %s9 = scalar_select 0, %s8, %s6
  loop: start=0, step=1, limit=4
  $region2: #{patch_expand.1} parent=0 // loop_pre_header
    _
  $region3: #{patch_expand.1} parent=0 // loop_header
    %s11 = sphi 0, %s15
    %p12 = scmp.ge.s32.totalorder %s11, 4
    %s21 = sphi 0, %s23
    %s24 = sphi 0, %s21
    %s25 = sphi 0, %s24
    %s41 = sphi 0, %s25
    %s45 = sphi 0, %s45
    %s47 = sphi 0, %s45
    %s48 = sphi 0, %s47
    %s62 = sphi 0, %s48
    %s66 = sphi 0, %s66
    %s68 = sphi 0, %s66
    %s69 = sphi 0, %s68
    %s83 = sphi 0, %s69
    %s87 = sphi 0, %s87
    %s89 = sphi 0, %s87
    %s90 = sphi 0, %s89
    %s104 = sphi 0, %s90
    %s108 = sphi 0, %s108
    %s110 = sphi 0, %s108
    %s111 = sphi 0, %s110
    %s125 = sphi 0, %s111
    %s131 = sphi 0, %s133
    %s134 = sphi 0, %s131
    %s135 = sphi 0, %s134
    %s151 = sphi 0, %s135
  $region4: #{patch_expand.1} parent=0 // loop_header_branch
    %14 = sbr.rel (%p12) target = $region8
  $region5: #{patch_expand.1} parent=0 // loop_body
    %s16 = ssub.s32 %s11, 1
    %s17 = ssub.s32 %s11, 2
    %s18 = sadd.s32 %s11, 1
    %s19 = ssub.s32 %s11, %s18
    %p20 = scmp.eq.s32.totalorder %s19, 0
    %s22 = sadd.s32 %s21, 1
    %s23 = scalar_select %p20, %s21, %s22
    %p26 = pneg %p20
    %p27 = scmp.eq.s32.totalorder %s11, 1
    %p28 = por %p26, %p27
    %p29 = scmp.ne.s32.totalorder %s21, %s24
    %p30 = scmp.eq.s32.totalorder %s11, 0
    %p31 = por %p29, %p30
    %p32 = scmp.ne.s32.totalorder %s21, %s24
    %p33 = scmp.eq.s32.totalorder %s16, 1
    %p34 = por %p32, %p33
    %p35 = scmp.ne.s32.totalorder %s24, %s25
    %p36 = scmp.eq.s32.totalorder %s16, 0
    %p37 = por %p35, %p36
    %p38 = scmp.ne.s32.totalorder %s24, %s25
    %p39 = scmp.eq.s32.totalorder %s17, 1
    %p40 = por %p38, %p39
    %p42 = scmp.ne.s32.totalorder %s25, %s41
    %p43 = scmp.eq.s32.totalorder %s17, 0
    %p44 = por %p42, %p43
    %s46 = sadd.s32 %s45, 1
    %p49 = scmp.eq.s32.totalorder %s11, 1
    %p50 = scmp.ne.s32.totalorder %s45, %s47
    %p51 = scmp.eq.s32.totalorder %s11, 0
    %p52 = por %p50, %p51
    %p53 = scmp.ne.s32.totalorder %s45, %s47
    %p54 = scmp.eq.s32.totalorder %s16, 1
    %p55 = por %p53, %p54
    %p56 = scmp.ne.s32.totalorder %s47, %s48
    %p57 = scmp.eq.s32.totalorder %s16, 0
    %p58 = por %p56, %p57
    %p59 = scmp.ne.s32.totalorder %s47, %s48
    %p60 = scmp.eq.s32.totalorder %s17, 1
    %p61 = por %p59, %p60
    %p63 = scmp.ne.s32.totalorder %s48, %s62
    %p64 = scmp.eq.s32.totalorder %s17, 0
    %p65 = por %p63, %p64
    %s67 = sadd.s32 %s66, 1
    %p70 = scmp.eq.s32.totalorder %s11, 1
    %p71 = scmp.ne.s32.totalorder %s66, %s68
    %p72 = scmp.eq.s32.totalorder %s11, 0
    %p73 = por %p71, %p72
    %p74 = scmp.ne.s32.totalorder %s66, %s68
    %p75 = scmp.eq.s32.totalorder %s16, 1
    %p76 = por %p74, %p75
    %p77 = scmp.ne.s32.totalorder %s68, %s69
    %p78 = scmp.eq.s32.totalorder %s16, 0
    %p79 = por %p77, %p78
    %p80 = scmp.ne.s32.totalorder %s68, %s69
    %p81 = scmp.eq.s32.totalorder %s17, 1
    %p82 = por %p80, %p81
    %p84 = scmp.ne.s32.totalorder %s69, %s83
    %p85 = scmp.eq.s32.totalorder %s17, 0
    %p86 = por %p84, %p85
    %s88 = sadd.s32 %s87, 1
    %p91 = scmp.eq.s32.totalorder %s11, 1
    %p92 = scmp.ne.s32.totalorder %s87, %s89
    %p93 = scmp.eq.s32.totalorder %s11, 0
    %p94 = por %p92, %p93
    %p95 = scmp.ne.s32.totalorder %s87, %s89
    %p96 = scmp.eq.s32.totalorder %s16, 1
    %p97 = por %p95, %p96
    %p98 = scmp.ne.s32.totalorder %s89, %s90
    %p99 = scmp.eq.s32.totalorder %s16, 0
    %p100 = por %p98, %p99
    %p101 = scmp.ne.s32.totalorder %s89, %s90
    %p102 = scmp.eq.s32.totalorder %s17, 1
    %p103 = por %p101, %p102
    %p105 = scmp.ne.s32.totalorder %s90, %s104
    %p106 = scmp.eq.s32.totalorder %s17, 0
    %p107 = por %p105, %p106
    %s109 = sadd.s32 %s108, 1
    %p112 = scmp.eq.s32.totalorder %s11, 1
    %p113 = scmp.ne.s32.totalorder %s108, %s110
    %p114 = scmp.eq.s32.totalorder %s11, 0
    %p115 = por %p113, %p114
    %p116 = scmp.ne.s32.totalorder %s108, %s110
    %p117 = scmp.eq.s32.totalorder %s16, 1
    %p118 = por %p116, %p117
    %p119 = scmp.ne.s32.totalorder %s110, %s111
    %p120 = scmp.eq.s32.totalorder %s16, 0
    %p121 = por %p119, %p120
    %p122 = scmp.ne.s32.totalorder %s110, %s111
    %p123 = scmp.eq.s32.totalorder %s17, 1
    %p124 = por %p122, %p123
    %p126 = scmp.ne.s32.totalorder %s111, %s125
    %p127 = scmp.eq.s32.totalorder %s17, 0
    %p128 = por %p126, %p127
    %s129 = ssub.s32 %s11, %s18
    %p130 = scmp.eq.s32.totalorder %s129, 0
    %s132 = sadd.s32 %s131, 1
    %s133 = scalar_select %p130, %s131, %s132
    %p136 = pneg %p130
    %p137 = scmp.eq.s32.totalorder %s11, 1
    %p138 = por %p136, %p137
    %p139 = scmp.ne.s32.totalorder %s131, %s134
    %p140 = scmp.eq.s32.totalorder %s11, 0
    %p141 = por %p139, %p140
    %p142 = scmp.ne.s32.totalorder %s131, %s134
    %p143 = scmp.eq.s32.totalorder %s16, 1
    %p144 = por %p142, %p143
    %p145 = scmp.ne.s32.totalorder %s134, %s135
    %p146 = scmp.eq.s32.totalorder %s16, 0
    %p147 = por %p145, %p146
    %p148 = scmp.ne.s32.totalorder %s134, %s135
    %p149 = scmp.eq.s32.totalorder %s17, 1
    %p150 = por %p148, %p149
    %p152 = scmp.ne.s32.totalorder %s135, %s151
    %p153 = scmp.eq.s32.totalorder %s17, 0
    %p154 = por %p152, %p153
    %p155 = scmp.le.s32.totalorder 1, %s11
    %p156 = scmp.lt.s32.totalorder %s11, 3
    %p157 = pnand %p155, %p156
    %p158 = pneg %p157
    // Predicated region
    $region9: #{patch_expand.1} parent=5 // pred_check
      _
    $region10: #{patch_expand.1} parent=5 // pred_check_branch
      %160 = sbr.rel (%p157) target = $region12
    $region11: #{patch_expand.1} parent=5 // pred_region
      %s161 = ssub.s32 %s11, 1
      // Predicated region
      $region13: #{patch_expand.1} parent=11 // pred_check
        %p162 = pneg %p58
      $region14: #{patch_expand.1} parent=11 // pred_check_branch
        %164 = sbr.rel (%p162) target = $region16
      $region15: #{patch_expand.1} parent=11 // pred_region
        _
      $region16: #{patch_expand.1} parent=11 // pred_fallthru
        _
      // Predicated region
      $region17: #{patch_expand.1} parent=11 // pred_check
        %p165 = pneg %p79
      $region18: #{patch_expand.1} parent=11 // pred_check_branch
        %167 = sbr.rel (%p165) target = $region20
      $region19: #{patch_expand.1} parent=11 // pred_region
        _
      $region20: #{patch_expand.1} parent=11 // pred_fallthru
        _
      // Predicated region
      $region21: #{patch_expand.1} parent=11 // pred_check
        %p168 = pneg %p100
      $region22: #{patch_expand.1} parent=11 // pred_check_branch
        %170 = sbr.rel (%p168) target = $region24
      $region23: #{patch_expand.1} parent=11 // pred_region
        _
      $region24: #{patch_expand.1} parent=11 // pred_fallthru
        _
      // Predicated region
      $region25: #{patch_expand.1} parent=11 // pred_check
        %p171 = pneg %p121
      $region26: #{patch_expand.1} parent=11 // pred_check_branch
        %173 = sbr.rel (%p171) target = $region28
      $region27: #{patch_expand.1} parent=11 // pred_region
        _
      $region28: #{patch_expand.1} parent=11 // pred_fallthru
        _
    $region12: #{patch_expand.1} parent=5 // pred_fallthru
      _
    %p174 = scmp.lt.s32.totalorder %s11, 2
    // Predicated region
    $region29: #{patch_expand.1} parent=5 // pred_check
      %p175 = pneg %p174
    $region30: #{patch_expand.1} parent=5 // pred_check_branch
      %177 = sbr.rel (%p175) target = $region32
    $region31: #{patch_expand.1} parent=5 // pred_region
      // Predicated region
      $region33: #{patch_expand.1} parent=31 // pred_check
        %p178 = pneg %p31
      $region34: #{patch_expand.1} parent=31 // pred_check_branch
        %180 = sbr.rel (%p178) target = $region36
      $region35: #{patch_expand.1} parent=31 // pred_region
        %s181 = smul.u32 8, %s11
        %p182 = scmp.lt.s32.totalorder %s181, 15
        %s183 = scalar_select %p182, %s181, 15
        %s184 = smul.addr %s183, 4
        %s185 = scalar_lea.vmem %s0, %s184
        %s186 = smul.u32 8, %s11
      $region36: #{patch_expand.1} parent=31 // pred_fallthru
        _
    $region32: #{patch_expand.1} parent=5 // pred_fallthru
      _
    %p187 = scmp.le.s32.totalorder 1, %s11
    %p188 = scmp.lt.s32.totalorder %s11, 3
    %p189 = pnand %p187, %p188
    %p190 = pneg %p189
    // Predicated region
    $region37: #{patch_expand.1} parent=5 // pred_check
      _
    $region38: #{patch_expand.1} parent=5 // pred_check_branch
      %192 = sbr.rel (%p189) target = $region40
    $region39: #{patch_expand.1} parent=5 // pred_region
      %s193 = ssub.s32 %s11, 1
      %s194 = smul.u32 8, %s16
      %p195 = scmp.lt.s32.totalorder %s194, 15
      %s196 = scalar_select %p195, %s194, 15
      %s197 = smul.addr %s196, 4
      %s198 = scalar_lea.vmem %s0, %s197
      %p199 = pneg %p37
      %p200 = pneg %p34
      %p201 = pneg %p58
      %p202 = pneg %p55
      %p203 = pneg %p79
      %p204 = pneg %p76
      %p205 = pneg %p100
      %p206 = pneg %p97
      %p207 = pneg %p121
      %p208 = pneg %p118
      %p209 = pneg %p147
      %p210 = pneg %p144
      %s211 = smul.u32 8, %s16
      %p212 = scmp.lt.s32.totalorder %s211, 15
      %s213 = scalar_select %p212, %s211, 15
      %s214 = smul.addr %s213, 2
      %s215 = smul.addr %s214, 8
      %s216 = scalar_lea.vmem %s5, %s215
      %s217 = smul.u32 8, %s16
      %p218 = scmp.lt.s32.totalorder %s217, 15
      %s219 = scalar_select %p218, %s217, 15
      %s220 = smul.addr %s219, 4
      %s221 = scalar_lea.vmem %s0, %s220
      %s222 = smul.u32 8, %s16
      %s223 = smul.u32 8, %s16
      %p224 = scmp.lt.s32.totalorder %s223, 15
      %s225 = scalar_select %p224, %s223, 15
      %s226 = smul.addr %s225, 2
      %s227 = smul.addr %s226, 8
      %s228 = scalar_lea.vmem %s5, %s227
      %s229 = smul.u32 8, %s16
      %v231 = vld [vmem:[%s221] sm:$0xf]
      %v232 = vld [vmem:[%s221 + $0x4] sm:$0xf]
      %v233 = vld [vmem:[%s221 + $0x8] sm:$0xf]
      %v234 = vld [vmem:[%s221 + $0xc] sm:$0xf]
      %v235 = vld [vmem:[%s221 + $0x10] sm:$0xf]
      %v236 = vld [vmem:[%s221 + $0x14] sm:$0xf]
      %v237 = vld [vmem:[%s221 + $0x18] sm:$0xf]
      %v238 = vld [vmem:[%s221 + $0x1c] sm:$0xf]
      %v239 = vld [vmem:[%s1] sm:$0xf]
      %v240 = vld [vmem:[%s1 + $0x4] sm:$0xf]
      %v241 = vld [vmem:[%s1 + $0x8] sm:$0xf]
      %v242 = vld [vmem:[%s1 + $0xc] sm:$0xf]
      %v243 = vld [vmem:[%s1 + $0x10] sm:$0xf]
      %v244 = vld [vmem:[%s1 + $0x14] sm:$0xf]
      %v245 = vld [vmem:[%s1 + $0x18] sm:$0xf]
      %v246 = vld [vmem:[%s1 + $0x1c] sm:$0xf]
      %v247 = vld [vmem:[%s2] sm:$0x1]
      %v249 = vperm.slane %v247, 0
      %v259 = vunpack.c.l.b16 %v231
      %v260 = vunpack.c.l.b16 %v232
      %v261 = vunpack.c.l.b16 %v233
      %v262 = vunpack.c.l.b16 %v234
      %v263 = vunpack.c.l.b16 %v235
      %v264 = vunpack.c.l.b16 %v236
      %v265 = vunpack.c.l.b16 %v237
      %v266 = vunpack.c.l.b16 %v238
      %v267 = vpack.c.b16 %v260, %v259
      %v268 = vpack.c.b16 %v262, %v261
      %v269 = vpack.c.b16 %v264, %v263
      %v270 = vpack.c.b16 %v266, %v265
      %v279 = vunpack.c.l.b16 %v239
      %v280 = vunpack.c.l.b16 %v240
      %v281 = vunpack.c.l.b16 %v241
      %v282 = vunpack.c.l.b16 %v242
      %v283 = vunpack.c.l.b16 %v243
      %v284 = vunpack.c.l.b16 %v244
      %v285 = vunpack.c.l.b16 %v245
      %v286 = vunpack.c.l.b16 %v246
      %v287 = vpack.c.b16 %v280, %v279
      %v288 = vpack.c.b16 %v282, %v281
      %v289 = vpack.c.b16 %v284, %v283
      %v290 = vpack.c.b16 %v286, %v285
      %vm295 = vcmask 523264
      %v297 = vsel %vm295, %v267, 0
      %v300 = vsel %vm295, %v268, 0
      %v303 = vsel %vm295, %v269, 0
      %v306 = vsel %vm295, %v270, 0
      %308 = vmatpush.bf16.msra.mxu0 0
      %309 = vmatpush.bf16.msra.mxu0 0
      %310 = vmatpush.bf16.msra.mxu0 0
      %311 = vmatpush.bf16.msra.mxu0 0
      %312 = vmatpush.bf16.msra.mxu0 %v290
      %313 = vmatpush.bf16.msra.mxu0 %v289
      %314 = vmatpush.bf16.msra.mxu0 %v288
      %315 = vmatpush.bf16.msra.mxu0 %v287
      %316 = vmatmul.bf16.gmra.mxu0 %v297
      %v317 = vpop.f32.mrf.mxu0
      %v318 = vadd.f32 %v249, %v317
      %v319 = vpop.f32.mrf.mxu0
      %v320 = vadd.f32 %v249, %v319
      %321 = vmatmul.bf16.gmra.mxu0 %v300
      %v322 = vpop.f32.mrf.mxu0
      %v323 = vadd.f32 %v249, %v322
      %v324 = vpop.f32.mrf.mxu0
      %v325 = vadd.f32 %v249, %v324
      %326 = vmatmul.bf16.gmra.mxu0 %v303
      %v327 = vpop.f32.mrf.mxu0
      %v328 = vadd.f32 %v249, %v327
      %v329 = vpop.f32.mrf.mxu0
      %v330 = vadd.f32 %v249, %v329
      %331 = vmatmul.bf16.gmra.mxu0 %v306
      %v332 = vpop.f32.mrf.mxu0
      %v333 = vadd.f32 %v249, %v332
      %v334 = vpop.f32.mrf.mxu0
      %v335 = vadd.f32 %v249, %v334
      %336 = vdwg.mxu0
      %v337 = vld [vmem:[%s3] sm:$0x1]
      %v338 = vld [vmem:[%s4] sm:$0x1]
      %vm339 = vcmask 261120
      %v340 = vsel %vm339, %v318, 0.0
      %341 = vadd.xlane.f32.xlu0 %v340
      %v342 = vpop.xlane.xlu0 %341
      %v343 = vsel %vm339, %v320, 0.0
      %344 = vadd.xlane.f32.xlu0 %v343
      %v345 = vpop.xlane.xlu0 %344
      %v346 = vsel %vm339, %v323, 0.0
      %347 = vadd.xlane.f32.xlu0 %v346
      %v348 = vpop.xlane.xlu0 %347
      %v349 = vsel %vm339, %v325, 0.0
      %350 = vadd.xlane.f32.xlu0 %v349
      %v351 = vpop.xlane.xlu0 %350
      %v352 = vsel %vm339, %v328, 0.0
      %353 = vadd.xlane.f32.xlu0 %v352
      %v354 = vpop.xlane.xlu0 %353
      %v355 = vsel %vm339, %v330, 0.0
      %356 = vadd.xlane.f32.xlu0 %v355
      %v357 = vpop.xlane.xlu0 %356
      %v358 = vsel %vm339, %v333, 0.0
      %359 = vadd.xlane.f32.xlu0 %v358
      %v360 = vpop.xlane.xlu0 %359
      %v361 = vsel %vm339, %v335, 0.0
      %362 = vadd.xlane.f32.xlu0 %v361
      %v363 = vpop.xlane.xlu0 %362
      %v364 = vrcp.pop 32.0
      %v365 = vmul.f32 32.0, %v364
      %v366 = vsub.f32 1.0, %v365
      %v367 = vmul.f32 %v364, %v366
      %v368 = vadd.f32 %v364, %v367
      %vm369 = vweird.f32 %v364
      %v370 = vsel %vm369, %v364, %v368
      %v371 = vmul.f32 %v342, %v370
      %v372 = vmul.f32 %v345, %v370
      %v373 = vmul.f32 %v348, %v370
      %v374 = vmul.f32 %v351, %v370
      %v375 = vmul.f32 %v354, %v370
      %v376 = vmul.f32 %v357, %v370
      %v377 = vmul.f32 %v360, %v370
      %v378 = vmul.f32 %v363, %v370
      %v379 = vsub.f32 %v318, %v371
      %v380 = vsub.f32 %v320, %v372
      %v381 = vsub.f32 %v323, %v373
      %v382 = vsub.f32 %v325, %v374
      %v383 = vsub.f32 %v328, %v375
      %v384 = vsub.f32 %v330, %v376
      %v385 = vsub.f32 %v333, %v377
      %v386 = vsub.f32 %v335, %v378
      %v387 = vmul.f32 %v379, %v379
      %v388 = vmul.f32 %v380, %v380
      %v389 = vmul.f32 %v381, %v381
      %v390 = vmul.f32 %v382, %v382
      %v391 = vmul.f32 %v383, %v383
      %v392 = vmul.f32 %v384, %v384
      %v393 = vmul.f32 %v385, %v385
      %v394 = vmul.f32 %v386, %v386
      %v395 = vsel %vm339, %v387, 0.0
      %396 = vadd.xlane.f32.xlu0 %v395
      %v397 = vpop.xlane.xlu0 %396
      %v398 = vsel %vm339, %v388, 0.0
      %399 = vadd.xlane.f32.xlu0 %v398
      %v400 = vpop.xlane.xlu0 %399
      %v401 = vsel %vm339, %v389, 0.0
      %402 = vadd.xlane.f32.xlu0 %v401
      %v403 = vpop.xlane.xlu0 %402
      %v404 = vsel %vm339, %v390, 0.0
      %405 = vadd.xlane.f32.xlu0 %v404
      %v406 = vpop.xlane.xlu0 %405
      %v407 = vsel %vm339, %v391, 0.0
      %408 = vadd.xlane.f32.xlu0 %v407
      %v409 = vpop.xlane.xlu0 %408
      %v410 = vsel %vm339, %v392, 0.0
      %411 = vadd.xlane.f32.xlu0 %v410
      %v412 = vpop.xlane.xlu0 %411
      %v413 = vsel %vm339, %v393, 0.0
      %414 = vadd.xlane.f32.xlu0 %v413
      %v415 = vpop.xlane.xlu0 %414
      %v416 = vsel %vm339, %v394, 0.0
      %417 = vadd.xlane.f32.xlu0 %v416
      %v418 = vpop.xlane.xlu0 %417
      %v419 = vmul.f32 %v397, %v370
      %v420 = vmul.f32 %v400, %v370
      %v421 = vmul.f32 %v403, %v370
      %v422 = vmul.f32 %v406, %v370
      %v423 = vmul.f32 %v409, %v370
      %v424 = vmul.f32 %v412, %v370
      %v425 = vmul.f32 %v415, %v370
      %v426 = vmul.f32 %v418, %v370
      %v427 = vadd.f32 %v419, 1e-05
      %v428 = vadd.f32 %v420, 1e-05
      %v429 = vadd.f32 %v421, 1e-05
      %v430 = vadd.f32 %v422, 1e-05
      %v431 = vadd.f32 %v423, 1e-05
      %v432 = vadd.f32 %v424, 1e-05
      %v433 = vadd.f32 %v425, 1e-05
      %v434 = vadd.f32 %v426, 1e-05
      %v435 = vrsqrt.pop %v427
      %v436 = vmul.f32 %v435, %v427
      %v437 = vmul.f32 %v436, %v435
      %v438 = vmul.f32 0.5, %v437
      %v439 = vsub.f32 1.5, %v438
      %v440 = vmul.f32 %v435, %v439
      %vm441 = vweird.f32 %v427
      %vm442 = vweird.f32 %v435
      %vm443 = vmor %vm441, %vm442
      %v444 = vsel %vm443, %v435, %v440
      %v445 = vrsqrt.pop %v428
      %v446 = vmul.f32 %v445, %v428
      %v447 = vmul.f32 %v446, %v445
      %v448 = vmul.f32 0.5, %v447
      %v449 = vsub.f32 1.5, %v448
      %v450 = vmul.f32 %v445, %v449
      %vm451 = vweird.f32 %v428
      %vm452 = vweird.f32 %v445
      %vm453 = vmor %vm451, %vm452
      %v454 = vsel %vm453, %v445, %v450
      %v455 = vrsqrt.pop %v429
      %v456 = vmul.f32 %v455, %v429
      %v457 = vmul.f32 %v456, %v455
      %v458 = vmul.f32 0.5, %v457
      %v459 = vsub.f32 1.5, %v458
      %v460 = vmul.f32 %v455, %v459
      %vm461 = vweird.f32 %v429
      %vm462 = vweird.f32 %v455
      %vm463 = vmor %vm461, %vm462
      %v464 = vsel %vm463, %v455, %v460
      %v465 = vrsqrt.pop %v430
      %v466 = vmul.f32 %v465, %v430
      %v467 = vmul.f32 %v466, %v465
      %v468 = vmul.f32 0.5, %v467
      %v469 = vsub.f32 1.5, %v468
      %v470 = vmul.f32 %v465, %v469
      %vm471 = vweird.f32 %v430
      %vm472 = vweird.f32 %v465
      %vm473 = vmor %vm471, %vm472
      %v474 = vsel %vm473, %v465, %v470
      %v475 = vrsqrt.pop %v431
      %v476 = vmul.f32 %v475, %v431
      %v477 = vmul.f32 %v476, %v475
      %v478 = vmul.f32 0.5, %v477
      %v479 = vsub.f32 1.5, %v478
      %v480 = vmul.f32 %v475, %v479
      %vm481 = vweird.f32 %v431
      %vm482 = vweird.f32 %v475
      %vm483 = vmor %vm481, %vm482
      %v484 = vsel %vm483, %v475, %v480
      %v485 = vrsqrt.pop %v432
      %v486 = vmul.f32 %v485, %v432
      %v487 = vmul.f32 %v486, %v485
      %v488 = vmul.f32 0.5, %v487
      %v489 = vsub.f32 1.5, %v488
      %v490 = vmul.f32 %v485, %v489
      %vm491 = vweird.f32 %v432
      %vm492 = vweird.f32 %v485
      %vm493 = vmor %vm491, %vm492
      %v494 = vsel %vm493, %v485, %v490
      %v495 = vrsqrt.pop %v433
      %v496 = vmul.f32 %v495, %v433
      %v497 = vmul.f32 %v496, %v495
      %v498 = vmul.f32 0.5, %v497
      %v499 = vsub.f32 1.5, %v498
      %v500 = vmul.f32 %v495, %v499
      %vm501 = vweird.f32 %v433
      %vm502 = vweird.f32 %v495
      %vm503 = vmor %vm501, %vm502
      %v504 = vsel %vm503, %v495, %v500
      %v505 = vrsqrt.pop %v434
      %v506 = vmul.f32 %v505, %v434
      %v507 = vmul.f32 %v506, %v505
      %v508 = vmul.f32 0.5, %v507
      %v509 = vsub.f32 1.5, %v508
      %v510 = vmul.f32 %v505, %v509
      %vm511 = vweird.f32 %v434
      %vm512 = vweird.f32 %v505
      %vm513 = vmor %vm511, %vm512
      %v514 = vsel %vm513, %v505, %v510
      %v515 = vmul.f32 %v379, %v444
      %v516 = vmul.f32 %v380, %v454
      %v517 = vmul.f32 %v381, %v464
      %v518 = vmul.f32 %v382, %v474
      %v519 = vmul.f32 %v383, %v484
      %v520 = vmul.f32 %v384, %v494
      %v521 = vmul.f32 %v385, %v504
      %v522 = vmul.f32 %v386, %v514
      %v524 = vperm.slane %v337, 0
      %v526 = vmul.f32 %v515, %v524
      %v527 = vmul.f32 %v516, %v524
      %v528 = vmul.f32 %v517, %v524
      %v529 = vmul.f32 %v518, %v524
      %v530 = vmul.f32 %v519, %v524
      %v531 = vmul.f32 %v520, %v524
      %v532 = vmul.f32 %v521, %v524
      %v533 = vmul.f32 %v522, %v524
      %v535 = vperm.slane %v338, 0
      %v537 = vadd.f32 %v526, %v535
      %v538 = vadd.f32 %v527, %v535
      %v539 = vadd.f32 %v528, %v535
      %v540 = vadd.f32 %v529, %v535
      %v541 = vadd.f32 %v530, %v535
      %v542 = vadd.f32 %v531, %v535
      %v543 = vadd.f32 %v532, %v535
      %v544 = vadd.f32 %v533, %v535
      %545 = vst.msk [vmem:[%s228] sm:$0xff] %vm339, %v537
      %546 = vst.msk [vmem:[%s228 + $0x10] sm:$0xff] %vm339, %v538
      %547 = vst.msk [vmem:[%s228 + $0x20] sm:$0xff] %vm339, %v539
      %548 = vst.msk [vmem:[%s228 + $0x30] sm:$0xff] %vm339, %v540
      %549 = vst.msk [vmem:[%s228 + $0x40] sm:$0xff] %vm339, %v541
      %550 = vst.msk [vmem:[%s228 + $0x50] sm:$0xff] %vm339, %v542
      %551 = vst.msk [vmem:[%s228 + $0x60] sm:$0xff] %vm339, %v543
      %552 = vst.msk [vmem:[%s228 + $0x70] sm:$0xff] %vm339, %v544
      %561 = vrot.lane.b32.xlu0 %v318, 96
      %v562 = vpop.permute.xlu0 %561
      %563 = vrot.lane.b32.xlu0 %v320, 96
      %v564 = vpop.permute.xlu0 %563
      %565 = vrot.lane.b32.xlu0 %v323, 96
      %v566 = vpop.permute.xlu0 %565
      %567 = vrot.lane.b32.xlu0 %v325, 96
      %v568 = vpop.permute.xlu0 %567
      %569 = vrot.lane.b32.xlu0 %v328, 96
      %v570 = vpop.permute.xlu0 %569
      %571 = vrot.lane.b32.xlu0 %v330, 96
      %v572 = vpop.permute.xlu0 %571
      %573 = vrot.lane.b32.xlu0 %v333, 96
      %v574 = vpop.permute.xlu0 %573
      %575 = vrot.lane.b32.xlu0 %v335, 96
      %v576 = vpop.permute.xlu0 %575
      %v585 = vsel %vm339, %v562, 0.0
      %586 = vadd.xlane.f32.xlu0 %v585
      %v587 = vpop.xlane.xlu0 %586
      %v588 = vsel %vm339, %v564, 0.0
      %589 = vadd.xlane.f32.xlu0 %v588
      %v590 = vpop.xlane.xlu0 %589
      %v591 = vsel %vm339, %v566, 0.0
      %592 = vadd.xlane.f32.xlu0 %v591
      %v593 = vpop.xlane.xlu0 %592
      %v594 = vsel %vm339, %v568, 0.0
      %595 = vadd.xlane.f32.xlu0 %v594
      %v596 = vpop.xlane.xlu0 %595
      %v597 = vsel %vm339, %v570, 0.0
      %598 = vadd.xlane.f32.xlu0 %v597
      %v599 = vpop.xlane.xlu0 %598
      %v600 = vsel %vm339, %v572, 0.0
      %601 = vadd.xlane.f32.xlu0 %v600
      %v602 = vpop.xlane.xlu0 %601
      %v603 = vsel %vm339, %v574, 0.0
      %604 = vadd.xlane.f32.xlu0 %v603
      %v605 = vpop.xlane.xlu0 %604
      %v606 = vsel %vm339, %v576, 0.0
      %607 = vadd.xlane.f32.xlu0 %v606
      %v608 = vpop.xlane.xlu0 %607
      %v609 = vmul.f32 %v587, %v370
      %v610 = vmul.f32 %v590, %v370
      %v611 = vmul.f32 %v593, %v370
      %v612 = vmul.f32 %v596, %v370
      %v613 = vmul.f32 %v599, %v370
      %v614 = vmul.f32 %v602, %v370
      %v615 = vmul.f32 %v605, %v370
      %v616 = vmul.f32 %v608, %v370
      %v617 = vsub.f32 %v318, %v609
      %v618 = vsub.f32 %v320, %v610
      %v619 = vsub.f32 %v323, %v611
      %v620 = vsub.f32 %v325, %v612
      %v621 = vsub.f32 %v328, %v613
      %v622 = vsub.f32 %v330, %v614
      %v623 = vsub.f32 %v333, %v615
      %v624 = vsub.f32 %v335, %v616
      %v625 = vmul.f32 %v617, %v617
      %v626 = vmul.f32 %v618, %v618
      %v627 = vmul.f32 %v619, %v619
      %v628 = vmul.f32 %v620, %v620
      %v629 = vmul.f32 %v621, %v621
      %v630 = vmul.f32 %v622, %v622
      %v631 = vmul.f32 %v623, %v623
      %v632 = vmul.f32 %v624, %v624
      %641 = vrot.lane.b32.xlu0 %v625, 96
      %v642 = vpop.permute.xlu0 %641
      %643 = vrot.lane.b32.xlu0 %v626, 96
      %v644 = vpop.permute.xlu0 %643
      %645 = vrot.lane.b32.xlu0 %v627, 96
      %v646 = vpop.permute.xlu0 %645
      %647 = vrot.lane.b32.xlu0 %v628, 96
      %v648 = vpop.permute.xlu0 %647
      %649 = vrot.lane.b32.xlu0 %v629, 96
      %v650 = vpop.permute.xlu0 %649
      %651 = vrot.lane.b32.xlu0 %v630, 96
      %v652 = vpop.permute.xlu0 %651
      %653 = vrot.lane.b32.xlu0 %v631, 96
      %v654 = vpop.permute.xlu0 %653
      %655 = vrot.lane.b32.xlu0 %v632, 96
      %v656 = vpop.permute.xlu0 %655
      %v665 = vsel %vm339, %v642, 0.0
      %666 = vadd.xlane.f32.xlu0 %v665
      %v667 = vpop.xlane.xlu0 %666
      %v668 = vsel %vm339, %v644, 0.0
      %669 = vadd.xlane.f32.xlu0 %v668
      %v670 = vpop.xlane.xlu0 %669
      %v671 = vsel %vm339, %v646, 0.0
      %672 = vadd.xlane.f32.xlu0 %v671
      %v673 = vpop.xlane.xlu0 %672
      %v674 = vsel %vm339, %v648, 0.0
      %675 = vadd.xlane.f32.xlu0 %v674
      %v676 = vpop.xlane.xlu0 %675
      %v677 = vsel %vm339, %v650, 0.0
      %678 = vadd.xlane.f32.xlu0 %v677
      %v679 = vpop.xlane.xlu0 %678
      %v680 = vsel %vm339, %v652, 0.0
      %681 = vadd.xlane.f32.xlu0 %v680
      %v682 = vpop.xlane.xlu0 %681
      %v683 = vsel %vm339, %v654, 0.0
      %684 = vadd.xlane.f32.xlu0 %v683
      %v685 = vpop.xlane.xlu0 %684
      %v686 = vsel %vm339, %v656, 0.0
      %687 = vadd.xlane.f32.xlu0 %v686
      %v688 = vpop.xlane.xlu0 %687
      %v689 = vmul.f32 %v667, %v370
      %v690 = vmul.f32 %v670, %v370
      %v691 = vmul.f32 %v673, %v370
      %v692 = vmul.f32 %v676, %v370
      %v693 = vmul.f32 %v679, %v370
      %v694 = vmul.f32 %v682, %v370
      %v695 = vmul.f32 %v685, %v370
      %v696 = vmul.f32 %v688, %v370
      %v697 = vadd.f32 %v689, 1e-05
      %v698 = vadd.f32 %v690, 1e-05
      %v699 = vadd.f32 %v691, 1e-05
      %v700 = vadd.f32 %v692, 1e-05
      %v701 = vadd.f32 %v693, 1e-05
      %v702 = vadd.f32 %v694, 1e-05
      %v703 = vadd.f32 %v695, 1e-05
      %v704 = vadd.f32 %v696, 1e-05
      %v705 = vrsqrt.pop %v697
      %v706 = vmul.f32 %v705, %v697
      %v707 = vmul.f32 %v706, %v705
      %v708 = vmul.f32 0.5, %v707
      %v709 = vsub.f32 1.5, %v708
      %v710 = vmul.f32 %v705, %v709
      %vm711 = vweird.f32 %v697
      %vm712 = vweird.f32 %v705
      %vm713 = vmor %vm711, %vm712
      %v714 = vsel %vm713, %v705, %v710
      %v715 = vrsqrt.pop %v698
      %v716 = vmul.f32 %v715, %v698
      %v717 = vmul.f32 %v716, %v715
      %v718 = vmul.f32 0.5, %v717
      %v719 = vsub.f32 1.5, %v718
      %v720 = vmul.f32 %v715, %v719
      %vm721 = vweird.f32 %v698
      %vm722 = vweird.f32 %v715
      %vm723 = vmor %vm721, %vm722
      %v724 = vsel %vm723, %v715, %v720
      %v725 = vrsqrt.pop %v699
      %v726 = vmul.f32 %v725, %v699
      %v727 = vmul.f32 %v726, %v725
      %v728 = vmul.f32 0.5, %v727
      %v729 = vsub.f32 1.5, %v728
      %v730 = vmul.f32 %v725, %v729
      %vm731 = vweird.f32 %v699
      %vm732 = vweird.f32 %v725
      %vm733 = vmor %vm731, %vm732
      %v734 = vsel %vm733, %v725, %v730
      %v735 = vrsqrt.pop %v700
      %v736 = vmul.f32 %v735, %v700
      %v737 = vmul.f32 %v736, %v735
      %v738 = vmul.f32 0.5, %v737
      %v739 = vsub.f32 1.5, %v738
      %v740 = vmul.f32 %v735, %v739
      %vm741 = vweird.f32 %v700
      %vm742 = vweird.f32 %v735
      %vm743 = vmor %vm741, %vm742
      %v744 = vsel %vm743, %v735, %v740
      %v745 = vrsqrt.pop %v701
      %v746 = vmul.f32 %v745, %v701
      %v747 = vmul.f32 %v746, %v745
      %v748 = vmul.f32 0.5, %v747
      %v749 = vsub.f32 1.5, %v748
      %v750 = vmul.f32 %v745, %v749
      %vm751 = vweird.f32 %v701
      %vm752 = vweird.f32 %v745
      %vm753 = vmor %vm751, %vm752
      %v754 = vsel %vm753, %v745, %v750
      %v755 = vrsqrt.pop %v702
      %v756 = vmul.f32 %v755, %v702
      %v757 = vmul.f32 %v756, %v755
      %v758 = vmul.f32 0.5, %v757
      %v759 = vsub.f32 1.5, %v758
      %v760 = vmul.f32 %v755, %v759
      %vm761 = vweird.f32 %v702
      %vm762 = vweird.f32 %v755
      %vm763 = vmor %vm761, %vm762
      %v764 = vsel %vm763, %v755, %v760
      %v765 = vrsqrt.pop %v703
      %v766 = vmul.f32 %v765, %v703
      %v767 = vmul.f32 %v766, %v765
      %v768 = vmul.f32 0.5, %v767
      %v769 = vsub.f32 1.5, %v768
      %v770 = vmul.f32 %v765, %v769
      %vm771 = vweird.f32 %v703
      %vm772 = vweird.f32 %v765
      %vm773 = vmor %vm771, %vm772
      %v774 = vsel %vm773, %v765, %v770
      %v775 = vrsqrt.pop %v704
      %v776 = vmul.f32 %v775, %v704
      %v777 = vmul.f32 %v776, %v775
      %v778 = vmul.f32 0.5, %v777
      %v779 = vsub.f32 1.5, %v778
      %v780 = vmul.f32 %v775, %v779
      %vm781 = vweird.f32 %v704
      %vm782 = vweird.f32 %v775
      %vm783 = vmor %vm781, %vm782
      %v784 = vsel %vm783, %v775, %v780
      %v785 = vmul.f32 %v617, %v714
      %v786 = vmul.f32 %v618, %v724
      %v787 = vmul.f32 %v619, %v734
      %v788 = vmul.f32 %v620, %v744
      %v789 = vmul.f32 %v621, %v754
      %v790 = vmul.f32 %v622, %v764
      %v791 = vmul.f32 %v623, %v774
      %v792 = vmul.f32 %v624, %v784
      %793 = vrot.lane.b32.xlu0 %v524, 32
      %v794 = vpop.permute.xlu0 %793
      %v796 = vmul.f32 %v785, %v794
      %v797 = vmul.f32 %v786, %v794
      %v798 = vmul.f32 %v787, %v794
      %v799 = vmul.f32 %v788, %v794
      %v800 = vmul.f32 %v789, %v794
      %v801 = vmul.f32 %v790, %v794
      %v802 = vmul.f32 %v791, %v794
      %v803 = vmul.f32 %v792, %v794
      %804 = vrot.lane.b32.xlu0 %v535, 32
      %v805 = vpop.permute.xlu0 %804
      %v807 = vadd.f32 %v796, %v805
      %v808 = vadd.f32 %v797, %v805
      %v809 = vadd.f32 %v798, %v805
      %v810 = vadd.f32 %v799, %v805
      %v811 = vadd.f32 %v800, %v805
      %v812 = vadd.f32 %v801, %v805
      %v813 = vadd.f32 %v802, %v805
      %v814 = vadd.f32 %v803, %v805
      %vm815 = vcmask 523520
      %816 = vst.msk [vmem:[%s228] sm:$0xff] %vm815, %v807
      %817 = vst.msk [vmem:[%s228 + $0x10] sm:$0xff] %vm815, %v808
      %818 = vst.msk [vmem:[%s228 + $0x20] sm:$0xff] %vm815, %v809
      %819 = vst.msk [vmem:[%s228 + $0x30] sm:$0xff] %vm815, %v810
      %820 = vst.msk [vmem:[%s228 + $0x40] sm:$0xff] %vm815, %v811
      %821 = vst.msk [vmem:[%s228 + $0x50] sm:$0xff] %vm815, %v812
      %822 = vst.msk [vmem:[%s228 + $0x60] sm:$0xff] %vm815, %v813
      %823 = vst.msk [vmem:[%s228 + $0x70] sm:$0xff] %vm815, %v814
      %824 = vrot.lane.b32.xlu0 %v318, 64
      %v825 = vpop.permute.xlu0 %824
      %826 = vrot.lane.b32.xlu0 %v320, 64
      %v827 = vpop.permute.xlu0 %826
      %828 = vrot.lane.b32.xlu0 %v323, 64
      %v829 = vpop.permute.xlu0 %828
      %830 = vrot.lane.b32.xlu0 %v325, 64
      %v831 = vpop.permute.xlu0 %830
      %832 = vrot.lane.b32.xlu0 %v328, 64
      %v833 = vpop.permute.xlu0 %832
      %834 = vrot.lane.b32.xlu0 %v330, 64
      %v835 = vpop.permute.xlu0 %834
      %836 = vrot.lane.b32.xlu0 %v333, 64
      %v837 = vpop.permute.xlu0 %836
      %838 = vrot.lane.b32.xlu0 %v335, 64
      %v839 = vpop.permute.xlu0 %838
      %v848 = vsel %vm339, %v825, 0.0
      %849 = vadd.xlane.f32.xlu0 %v848
      %v850 = vpop.xlane.xlu0 %849
      %v851 = vsel %vm339, %v827, 0.0
      %852 = vadd.xlane.f32.xlu0 %v851
      %v853 = vpop.xlane.xlu0 %852
      %v854 = vsel %vm339, %v829, 0.0
      %855 = vadd.xlane.f32.xlu0 %v854
      %v856 = vpop.xlane.xlu0 %855
      %v857 = vsel %vm339, %v831, 0.0
      %858 = vadd.xlane.f32.xlu0 %v857
      %v859 = vpop.xlane.xlu0 %858
      %v860 = vsel %vm339, %v833, 0.0
      %861 = vadd.xlane.f32.xlu0 %v860
      %v862 = vpop.xlane.xlu0 %861
      %v863 = vsel %vm339, %v835, 0.0
      %864 = vadd.xlane.f32.xlu0 %v863
      %v865 = vpop.xlane.xlu0 %864
      %v866 = vsel %vm339, %v837, 0.0
      %867 = vadd.xlane.f32.xlu0 %v866
      %v868 = vpop.xlane.xlu0 %867
      %v869 = vsel %vm339, %v839, 0.0
      %870 = vadd.xlane.f32.xlu0 %v869
      %v871 = vpop.xlane.xlu0 %870
      %v872 = vmul.f32 %v850, %v370
      %v873 = vmul.f32 %v853, %v370
      %v874 = vmul.f32 %v856, %v370
      %v875 = vmul.f32 %v859, %v370
      %v876 = vmul.f32 %v862, %v370
      %v877 = vmul.f32 %v865, %v370
      %v878 = vmul.f32 %v868, %v370
      %v879 = vmul.f32 %v871, %v370
      %v880 = vsub.f32 %v318, %v872
      %v881 = vsub.f32 %v320, %v873
      %v882 = vsub.f32 %v323, %v874
      %v883 = vsub.f32 %v325, %v875
      %v884 = vsub.f32 %v328, %v876
      %v885 = vsub.f32 %v330, %v877
      %v886 = vsub.f32 %v333, %v878
      %v887 = vsub.f32 %v335, %v879
      %v888 = vmul.f32 %v880, %v880
      %v889 = vmul.f32 %v881, %v881
      %v890 = vmul.f32 %v882, %v882
      %v891 = vmul.f32 %v883, %v883
      %v892 = vmul.f32 %v884, %v884
      %v893 = vmul.f32 %v885, %v885
      %v894 = vmul.f32 %v886, %v886
      %v895 = vmul.f32 %v887, %v887
      %904 = vrot.lane.b32.xlu0 %v888, 64
      %v905 = vpop.permute.xlu0 %904
      %906 = vrot.lane.b32.xlu0 %v889, 64
      %v907 = vpop.permute.xlu0 %906
      %908 = vrot.lane.b32.xlu0 %v890, 64
      %v909 = vpop.permute.xlu0 %908
      %910 = vrot.lane.b32.xlu0 %v891, 64
      %v911 = vpop.permute.xlu0 %910
      %912 = vrot.lane.b32.xlu0 %v892, 64
      %v913 = vpop.permute.xlu0 %912
      %914 = vrot.lane.b32.xlu0 %v893, 64
      %v915 = vpop.permute.xlu0 %914
      %916 = vrot.lane.b32.xlu0 %v894, 64
      %v917 = vpop.permute.xlu0 %916
      %918 = vrot.lane.b32.xlu0 %v895, 64
      %v919 = vpop.permute.xlu0 %918
      %v928 = vsel %vm339, %v905, 0.0
      %929 = vadd.xlane.f32.xlu0 %v928
      %v930 = vpop.xlane.xlu0 %929
      %v931 = vsel %vm339, %v907, 0.0
      %932 = vadd.xlane.f32.xlu0 %v931
      %v933 = vpop.xlane.xlu0 %932
      %v934 = vsel %vm339, %v909, 0.0
      %935 = vadd.xlane.f32.xlu0 %v934
      %v936 = vpop.xlane.xlu0 %935
      %v937 = vsel %vm339, %v911, 0.0
      %938 = vadd.xlane.f32.xlu0 %v937
      %v939 = vpop.xlane.xlu0 %938
      %v940 = vsel %vm339, %v913, 0.0
      %941 = vadd.xlane.f32.xlu0 %v940
      %v942 = vpop.xlane.xlu0 %941
      %v943 = vsel %vm339, %v915, 0.0
      %944 = vadd.xlane.f32.xlu0 %v943
      %v945 = vpop.xlane.xlu0 %944
      %v946 = vsel %vm339, %v917, 0.0
      %947 = vadd.xlane.f32.xlu0 %v946
      %v948 = vpop.xlane.xlu0 %947
      %v949 = vsel %vm339, %v919, 0.0
      %950 = vadd.xlane.f32.xlu0 %v949
      %v951 = vpop.xlane.xlu0 %950
      %v952 = vmul.f32 %v930, %v370
      %v953 = vmul.f32 %v933, %v370
      %v954 = vmul.f32 %v936, %v370
      %v955 = vmul.f32 %v939, %v370
      %v956 = vmul.f32 %v942, %v370
      %v957 = vmul.f32 %v945, %v370
      %v958 = vmul.f32 %v948, %v370
      %v959 = vmul.f32 %v951, %v370
      %v960 = vadd.f32 %v952, 1e-05
      %v961 = vadd.f32 %v953, 1e-05
      %v962 = vadd.f32 %v954, 1e-05
      %v963 = vadd.f32 %v955, 1e-05
      %v964 = vadd.f32 %v956, 1e-05
      %v965 = vadd.f32 %v957, 1e-05
      %v966 = vadd.f32 %v958, 1e-05
      %v967 = vadd.f32 %v959, 1e-05
      %v968 = vrsqrt.pop %v960
      %v969 = vmul.f32 %v968, %v960
      %v970 = vmul.f32 %v969, %v968
      %v971 = vmul.f32 0.5, %v970
      %v972 = vsub.f32 1.5, %v971
      %v973 = vmul.f32 %v968, %v972
      %vm974 = vweird.f32 %v960
      %vm975 = vweird.f32 %v968
      %vm976 = vmor %vm974, %vm975
      %v977 = vsel %vm976, %v968, %v973
      %v978 = vrsqrt.pop %v961
      %v979 = vmul.f32 %v978, %v961
      %v980 = vmul.f32 %v979, %v978
      %v981 = vmul.f32 0.5, %v980
      %v982 = vsub.f32 1.5, %v981
      %v983 = vmul.f32 %v978, %v982
      %vm984 = vweird.f32 %v961
      %vm985 = vweird.f32 %v978
      %vm986 = vmor %vm984, %vm985
      %v987 = vsel %vm986, %v978, %v983
      %v988 = vrsqrt.pop %v962
      %v989 = vmul.f32 %v988, %v962
      %v990 = vmul.f32 %v989, %v988
      %v991 = vmul.f32 0.5, %v990
      %v992 = vsub.f32 1.5, %v991
      %v993 = vmul.f32 %v988, %v992
      %vm994 = vweird.f32 %v962
      %vm995 = vweird.f32 %v988
      %vm996 = vmor %vm994, %vm995
      %v997 = vsel %vm996, %v988, %v993
      %v998 = vrsqrt.pop %v963
      %v999 = vmul.f32 %v998, %v963
      %v1000 = vmul.f32 %v999, %v998
      %v1001 = vmul.f32 0.5, %v1000
      %v1002 = vsub.f32 1.5, %v1001
      %v1003 = vmul.f32 %v998, %v1002
      %vm1004 = vweird.f32 %v963
      %vm1005 = vweird.f32 %v998
      %vm1006 = vmor %vm1004, %vm1005
      %v1007 = vsel %vm1006, %v998, %v1003
      %v1008 = vrsqrt.pop %v964
      %v1009 = vmul.f32 %v1008, %v964
      %v1010 = vmul.f32 %v1009, %v1008
      %v1011 = vmul.f32 0.5, %v1010
      %v1012 = vsub.f32 1.5, %v1011
      %v1013 = vmul.f32 %v1008, %v1012
      %vm1014 = vweird.f32 %v964
      %vm1015 = vweird.f32 %v1008
      %vm1016 = vmor %vm1014, %vm1015
      %v1017 = vsel %vm1016, %v1008, %v1013
      %v1018 = vrsqrt.pop %v965
      %v1019 = vmul.f32 %v1018, %v965
      %v1020 = vmul.f32 %v1019, %v1018
      %v1021 = vmul.f32 0.5, %v1020
      %v1022 = vsub.f32 1.5, %v1021
      %v1023 = vmul.f32 %v1018, %v1022
      %vm1024 = vweird.f32 %v965
      %vm1025 = vweird.f32 %v1018
      %vm1026 = vmor %vm1024, %vm1025
      %v1027 = vsel %vm1026, %v1018, %v1023
      %v1028 = vrsqrt.pop %v966
      %v1029 = vmul.f32 %v1028, %v966
      %v1030 = vmul.f32 %v1029, %v1028
      %v1031 = vmul.f32 0.5, %v1030
      %v1032 = vsub.f32 1.5, %v1031
      %v1033 = vmul.f32 %v1028, %v1032
      %vm1034 = vweird.f32 %v966
      %vm1035 = vweird.f32 %v1028
      %vm1036 = vmor %vm1034, %vm1035
      %v1037 = vsel %vm1036, %v1028, %v1033
      %v1038 = vrsqrt.pop %v967
      %v1039 = vmul.f32 %v1038, %v967
      %v1040 = vmul.f32 %v1039, %v1038
      %v1041 = vmul.f32 0.5, %v1040
      %v1042 = vsub.f32 1.5, %v1041
      %v1043 = vmul.f32 %v1038, %v1042
      %vm1044 = vweird.f32 %v967
      %vm1045 = vweird.f32 %v1038
      %vm1046 = vmor %vm1044, %vm1045
      %v1047 = vsel %vm1046, %v1038, %v1043
      %v1048 = vmul.f32 %v880, %v977
      %v1049 = vmul.f32 %v881, %v987
      %v1050 = vmul.f32 %v882, %v997
      %v1051 = vmul.f32 %v883, %v1007
      %v1052 = vmul.f32 %v884, %v1017
      %v1053 = vmul.f32 %v885, %v1027
      %v1054 = vmul.f32 %v886, %v1037
      %v1055 = vmul.f32 %v887, %v1047
      %1056 = vrot.lane.b32.xlu0 %v524, 64
      %v1057 = vpop.permute.xlu0 %1056
      %v1059 = vmul.f32 %v1048, %v1057
      %v1060 = vmul.f32 %v1049, %v1057
      %v1061 = vmul.f32 %v1050, %v1057
      %v1062 = vmul.f32 %v1051, %v1057
      %v1063 = vmul.f32 %v1052, %v1057
      %v1064 = vmul.f32 %v1053, %v1057
      %v1065 = vmul.f32 %v1054, %v1057
      %v1066 = vmul.f32 %v1055, %v1057
      %1067 = vrot.lane.b32.xlu0 %v535, 64
      %v1068 = vpop.permute.xlu0 %1067
      %v1070 = vadd.f32 %v1059, %v1068
      %v1071 = vadd.f32 %v1060, %v1068
      %v1072 = vadd.f32 %v1061, %v1068
      %v1073 = vadd.f32 %v1062, %v1068
      %v1074 = vadd.f32 %v1063, %v1068
      %v1075 = vadd.f32 %v1064, %v1068
      %v1076 = vadd.f32 %v1065, %v1068
      %v1077 = vadd.f32 %v1066, %v1068
      %1086 = vrot.lane.b32.xlu0 %v1070, 64
      %v1087 = vpop.permute.xlu0 %1086
      %1088 = vrot.lane.b32.xlu0 %v1071, 64
      %v1089 = vpop.permute.xlu0 %1088
      %1090 = vrot.lane.b32.xlu0 %v1072, 64
      %v1091 = vpop.permute.xlu0 %1090
      %1092 = vrot.lane.b32.xlu0 %v1073, 64
      %v1093 = vpop.permute.xlu0 %1092
      %1094 = vrot.lane.b32.xlu0 %v1074, 64
      %v1095 = vpop.permute.xlu0 %1094
      %1096 = vrot.lane.b32.xlu0 %v1075, 64
      %v1097 = vpop.permute.xlu0 %1096
      %1098 = vrot.lane.b32.xlu0 %v1076, 64
      %v1099 = vpop.permute.xlu0 %1098
      %1100 = vrot.lane.b32.xlu0 %v1077, 64
      %v1101 = vpop.permute.xlu0 %1100
      %s1110 = scalar_lea.vmem %s228, 8
      %1111 = vst.msk [vmem:[%s1110] sm:$0xff] %vm339, %v1087
      %1112 = vst.msk [vmem:[%s1110 + $0x10] sm:$0xff] %vm339, %v1089
      %1113 = vst.msk [vmem:[%s1110 + $0x20] sm:$0xff] %vm339, %v1091
      %1114 = vst.msk [vmem:[%s1110 + $0x30] sm:$0xff] %vm339, %v1093
      %1115 = vst.msk [vmem:[%s1110 + $0x40] sm:$0xff] %vm339, %v1095
      %1116 = vst.msk [vmem:[%s1110 + $0x50] sm:$0xff] %vm339, %v1097
      %1117 = vst.msk [vmem:[%s1110 + $0x60] sm:$0xff] %vm339, %v1099
      %1118 = vst.msk [vmem:[%s1110 + $0x70] sm:$0xff] %vm339, %v1101
      %1119 = vrot.lane.b32.xlu0 %v318, 32
      %v1120 = vpop.permute.xlu0 %1119
      %1121 = vrot.lane.b32.xlu0 %v320, 32
      %v1122 = vpop.permute.xlu0 %1121
      %1123 = vrot.lane.b32.xlu0 %v323, 32
      %v1124 = vpop.permute.xlu0 %1123
      %1125 = vrot.lane.b32.xlu0 %v325, 32
      %v1126 = vpop.permute.xlu0 %1125
      %1127 = vrot.lane.b32.xlu0 %v328, 32
      %v1128 = vpop.permute.xlu0 %1127
      %1129 = vrot.lane.b32.xlu0 %v330, 32
      %v1130 = vpop.permute.xlu0 %1129
      %1131 = vrot.lane.b32.xlu0 %v333, 32
      %v1132 = vpop.permute.xlu0 %1131
      %1133 = vrot.lane.b32.xlu0 %v335, 32
      %v1134 = vpop.permute.xlu0 %1133
      %v1143 = vsel %vm339, %v1120, 0.0
      %1144 = vadd.xlane.f32.xlu0 %v1143
      %v1145 = vpop.xlane.xlu0 %1144
      %v1146 = vsel %vm339, %v1122, 0.0
      %1147 = vadd.xlane.f32.xlu0 %v1146
      %v1148 = vpop.xlane.xlu0 %1147
      %v1149 = vsel %vm339, %v1124, 0.0
      %1150 = vadd.xlane.f32.xlu0 %v1149
      %v1151 = vpop.xlane.xlu0 %1150
      %v1152 = vsel %vm339, %v1126, 0.0
      %1153 = vadd.xlane.f32.xlu0 %v1152
      %v1154 = vpop.xlane.xlu0 %1153
      %v1155 = vsel %vm339, %v1128, 0.0
      %1156 = vadd.xlane.f32.xlu0 %v1155
      %v1157 = vpop.xlane.xlu0 %1156
      %v1158 = vsel %vm339, %v1130, 0.0
      %1159 = vadd.xlane.f32.xlu0 %v1158
      %v1160 = vpop.xlane.xlu0 %1159
      %v1161 = vsel %vm339, %v1132, 0.0
      %1162 = vadd.xlane.f32.xlu0 %v1161
      %v1163 = vpop.xlane.xlu0 %1162
      %v1164 = vsel %vm339, %v1134, 0.0
      %1165 = vadd.xlane.f32.xlu0 %v1164
      %v1166 = vpop.xlane.xlu0 %1165
      %v1167 = vmul.f32 %v1145, %v370
      %v1168 = vmul.f32 %v1148, %v370
      %v1169 = vmul.f32 %v1151, %v370
      %v1170 = vmul.f32 %v1154, %v370
      %v1171 = vmul.f32 %v1157, %v370
      %v1172 = vmul.f32 %v1160, %v370
      %v1173 = vmul.f32 %v1163, %v370
      %v1174 = vmul.f32 %v1166, %v370
      %v1175 = vsub.f32 %v318, %v1167
      %v1176 = vsub.f32 %v320, %v1168
      %v1177 = vsub.f32 %v323, %v1169
      %v1178 = vsub.f32 %v325, %v1170
      %v1179 = vsub.f32 %v328, %v1171
      %v1180 = vsub.f32 %v330, %v1172
      %v1181 = vsub.f32 %v333, %v1173
      %v1182 = vsub.f32 %v335, %v1174
      %v1183 = vmul.f32 %v1175, %v1175
      %v1184 = vmul.f32 %v1176, %v1176
      %v1185 = vmul.f32 %v1177, %v1177
      %v1186 = vmul.f32 %v1178, %v1178
      %v1187 = vmul.f32 %v1179, %v1179
      %v1188 = vmul.f32 %v1180, %v1180
      %v1189 = vmul.f32 %v1181, %v1181
      %v1190 = vmul.f32 %v1182, %v1182
      %1199 = vrot.lane.b32.xlu0 %v1183, 32
      %v1200 = vpop.permute.xlu0 %1199
      %1201 = vrot.lane.b32.xlu0 %v1184, 32
      %v1202 = vpop.permute.xlu0 %1201
      %1203 = vrot.lane.b32.xlu0 %v1185, 32
      %v1204 = vpop.permute.xlu0 %1203
      %1205 = vrot.lane.b32.xlu0 %v1186, 32
      %v1206 = vpop.permute.xlu0 %1205
      %1207 = vrot.lane.b32.xlu0 %v1187, 32
      %v1208 = vpop.permute.xlu0 %1207
      %1209 = vrot.lane.b32.xlu0 %v1188, 32
      %v1210 = vpop.permute.xlu0 %1209
      %1211 = vrot.lane.b32.xlu0 %v1189, 32
      %v1212 = vpop.permute.xlu0 %1211
      %1213 = vrot.lane.b32.xlu0 %v1190, 32
      %v1214 = vpop.permute.xlu0 %1213
      %v1223 = vsel %vm339, %v1200, 0.0
      %1224 = vadd.xlane.f32.xlu0 %v1223
      %v1225 = vpop.xlane.xlu0 %1224
      %v1226 = vsel %vm339, %v1202, 0.0
      %1227 = vadd.xlane.f32.xlu0 %v1226
      %v1228 = vpop.xlane.xlu0 %1227
      %v1229 = vsel %vm339, %v1204, 0.0
      %1230 = vadd.xlane.f32.xlu0 %v1229
      %v1231 = vpop.xlane.xlu0 %1230
      %v1232 = vsel %vm339, %v1206, 0.0
      %1233 = vadd.xlane.f32.xlu0 %v1232
      %v1234 = vpop.xlane.xlu0 %1233
      %v1235 = vsel %vm339, %v1208, 0.0
      %1236 = vadd.xlane.f32.xlu0 %v1235
      %v1237 = vpop.xlane.xlu0 %1236
      %v1238 = vsel %vm339, %v1210, 0.0
      %1239 = vadd.xlane.f32.xlu0 %v1238
      %v1240 = vpop.xlane.xlu0 %1239
      %v1241 = vsel %vm339, %v1212, 0.0
      %1242 = vadd.xlane.f32.xlu0 %v1241
      %v1243 = vpop.xlane.xlu0 %1242
      %v1244 = vsel %vm339, %v1214, 0.0
      %1245 = vadd.xlane.f32.xlu0 %v1244
      %v1246 = vpop.xlane.xlu0 %1245
      %v1247 = vmul.f32 %v1225, %v370
      %v1248 = vmul.f32 %v1228, %v370
      %v1249 = vmul.f32 %v1231, %v370
      %v1250 = vmul.f32 %v1234, %v370
      %v1251 = vmul.f32 %v1237, %v370
      %v1252 = vmul.f32 %v1240, %v370
      %v1253 = vmul.f32 %v1243, %v370
      %v1254 = vmul.f32 %v1246, %v370
      %v1255 = vadd.f32 %v1247, 1e-05
      %v1256 = vadd.f32 %v1248, 1e-05
      %v1257 = vadd.f32 %v1249, 1e-05
      %v1258 = vadd.f32 %v1250, 1e-05
      %v1259 = vadd.f32 %v1251, 1e-05
      %v1260 = vadd.f32 %v1252, 1e-05
      %v1261 = vadd.f32 %v1253, 1e-05
      %v1262 = vadd.f32 %v1254, 1e-05
      %v1263 = vrsqrt.pop %v1255
      %v1264 = vmul.f32 %v1263, %v1255
      %v1265 = vmul.f32 %v1264, %v1263
      %v1266 = vmul.f32 0.5, %v1265
      %v1267 = vsub.f32 1.5, %v1266
      %v1268 = vmul.f32 %v1263, %v1267
      %vm1269 = vweird.f32 %v1255
      %vm1270 = vweird.f32 %v1263
      %vm1271 = vmor %vm1269, %vm1270
      %v1272 = vsel %vm1271, %v1263, %v1268
      %v1273 = vrsqrt.pop %v1256
      %v1274 = vmul.f32 %v1273, %v1256
      %v1275 = vmul.f32 %v1274, %v1273
      %v1276 = vmul.f32 0.5, %v1275
      %v1277 = vsub.f32 1.5, %v1276
      %v1278 = vmul.f32 %v1273, %v1277
      %vm1279 = vweird.f32 %v1256
      %vm1280 = vweird.f32 %v1273
      %vm1281 = vmor %vm1279, %vm1280
      %v1282 = vsel %vm1281, %v1273, %v1278
      %v1283 = vrsqrt.pop %v1257
      %v1284 = vmul.f32 %v1283, %v1257
      %v1285 = vmul.f32 %v1284, %v1283
      %v1286 = vmul.f32 0.5, %v1285
      %v1287 = vsub.f32 1.5, %v1286
      %v1288 = vmul.f32 %v1283, %v1287
      %vm1289 = vweird.f32 %v1257
      %vm1290 = vweird.f32 %v1283
      %vm1291 = vmor %vm1289, %vm1290
      %v1292 = vsel %vm1291, %v1283, %v1288
      %v1293 = vrsqrt.pop %v1258
      %v1294 = vmul.f32 %v1293, %v1258
      %v1295 = vmul.f32 %v1294, %v1293
      %v1296 = vmul.f32 0.5, %v1295
      %v1297 = vsub.f32 1.5, %v1296
      %v1298 = vmul.f32 %v1293, %v1297
      %vm1299 = vweird.f32 %v1258
      %vm1300 = vweird.f32 %v1293
      %vm1301 = vmor %vm1299, %vm1300
      %v1302 = vsel %vm1301, %v1293, %v1298
      %v1303 = vrsqrt.pop %v1259
      %v1304 = vmul.f32 %v1303, %v1259
      %v1305 = vmul.f32 %v1304, %v1303
      %v1306 = vmul.f32 0.5, %v1305
      %v1307 = vsub.f32 1.5, %v1306
      %v1308 = vmul.f32 %v1303, %v1307
      %vm1309 = vweird.f32 %v1259
      %vm1310 = vweird.f32 %v1303
      %vm1311 = vmor %vm1309, %vm1310
      %v1312 = vsel %vm1311, %v1303, %v1308
      %v1313 = vrsqrt.pop %v1260
      %v1314 = vmul.f32 %v1313, %v1260
      %v1315 = vmul.f32 %v1314, %v1313
      %v1316 = vmul.f32 0.5, %v1315
      %v1317 = vsub.f32 1.5, %v1316
      %v1318 = vmul.f32 %v1313, %v1317
      %vm1319 = vweird.f32 %v1260
      %vm1320 = vweird.f32 %v1313
      %vm1321 = vmor %vm1319, %vm1320
      %v1322 = vsel %vm1321, %v1313, %v1318
      %v1323 = vrsqrt.pop %v1261
      %v1324 = vmul.f32 %v1323, %v1261
      %v1325 = vmul.f32 %v1324, %v1323
      %v1326 = vmul.f32 0.5, %v1325
      %v1327 = vsub.f32 1.5, %v1326
      %v1328 = vmul.f32 %v1323, %v1327
      %vm1329 = vweird.f32 %v1261
      %vm1330 = vweird.f32 %v1323
      %vm1331 = vmor %vm1329, %vm1330
      %v1332 = vsel %vm1331, %v1323, %v1328
      %v1333 = vrsqrt.pop %v1262
      %v1334 = vmul.f32 %v1333, %v1262
      %v1335 = vmul.f32 %v1334, %v1333
      %v1336 = vmul.f32 0.5, %v1335
      %v1337 = vsub.f32 1.5, %v1336
      %v1338 = vmul.f32 %v1333, %v1337
      %vm1339 = vweird.f32 %v1262
      %vm1340 = vweird.f32 %v1333
      %vm1341 = vmor %vm1339, %vm1340
      %v1342 = vsel %vm1341, %v1333, %v1338
      %v1343 = vmul.f32 %v1175, %v1272
      %v1344 = vmul.f32 %v1176, %v1282
      %v1345 = vmul.f32 %v1177, %v1292
      %v1346 = vmul.f32 %v1178, %v1302
      %v1347 = vmul.f32 %v1179, %v1312
      %v1348 = vmul.f32 %v1180, %v1322
      %v1349 = vmul.f32 %v1181, %v1332
      %v1350 = vmul.f32 %v1182, %v1342
      %1351 = vrot.lane.b32.xlu0 %v524, 96
      %v1352 = vpop.permute.xlu0 %1351
      %v1354 = vmul.f32 %v1343, %v1352
      %v1355 = vmul.f32 %v1344, %v1352
      %v1356 = vmul.f32 %v1345, %v1352
      %v1357 = vmul.f32 %v1346, %v1352
      %v1358 = vmul.f32 %v1347, %v1352
      %v1359 = vmul.f32 %v1348, %v1352
      %v1360 = vmul.f32 %v1349, %v1352
      %v1361 = vmul.f32 %v1350, %v1352
      %1362 = vrot.lane.b32.xlu0 %v535, 96
      %v1363 = vpop.permute.xlu0 %1362
      %v1365 = vadd.f32 %v1354, %v1363
      %v1366 = vadd.f32 %v1355, %v1363
      %v1367 = vadd.f32 %v1356, %v1363
      %v1368 = vadd.f32 %v1357, %v1363
      %v1369 = vadd.f32 %v1358, %v1363
      %v1370 = vadd.f32 %v1359, %v1363
      %v1371 = vadd.f32 %v1360, %v1363
      %v1372 = vadd.f32 %v1361, %v1363
      %1381 = vrot.lane.b32.xlu0 %v1365, 64
      %v1382 = vpop.permute.xlu0 %1381
      %1383 = vrot.lane.b32.xlu0 %v1366, 64
      %v1384 = vpop.permute.xlu0 %1383
      %1385 = vrot.lane.b32.xlu0 %v1367, 64
      %v1386 = vpop.permute.xlu0 %1385
      %1387 = vrot.lane.b32.xlu0 %v1368, 64
      %v1388 = vpop.permute.xlu0 %1387
      %1389 = vrot.lane.b32.xlu0 %v1369, 64
      %v1390 = vpop.permute.xlu0 %1389
      %1391 = vrot.lane.b32.xlu0 %v1370, 64
      %v1392 = vpop.permute.xlu0 %1391
      %1393 = vrot.lane.b32.xlu0 %v1371, 64
      %v1394 = vpop.permute.xlu0 %1393
      %1395 = vrot.lane.b32.xlu0 %v1372, 64
      %v1396 = vpop.permute.xlu0 %1395
      %1405 = vst.msk [vmem:[%s1110] sm:$0xff] %vm815, %v1382
      %1406 = vst.msk [vmem:[%s1110 + $0x10] sm:$0xff] %vm815, %v1384
      %1407 = vst.msk [vmem:[%s1110 + $0x20] sm:$0xff] %vm815, %v1386
      %1408 = vst.msk [vmem:[%s1110 + $0x30] sm:$0xff] %vm815, %v1388
      %1409 = vst.msk [vmem:[%s1110 + $0x40] sm:$0xff] %vm815, %v1390
      %1410 = vst.msk [vmem:[%s1110 + $0x50] sm:$0xff] %vm815, %v1392
      %1411 = vst.msk [vmem:[%s1110 + $0x60] sm:$0xff] %vm815, %v1394
      %1412 = vst.msk [vmem:[%s1110 + $0x70] sm:$0xff] %vm815, %v1396
      %s1413 = smul.u32 8, %s16
      %p1414 = scmp.lt.s32.totalorder %s1413, 15
      %s1415 = scalar_select %p1414, %s1413, 15
      %s1416 = smul.addr %s1415, 2
      %s1417 = smul.addr %s1416, 8
      %s1418 = scalar_lea.vmem %s5, %s1417
      // Predicated region
      $region41: #{patch_expand.1} parent=39 // pred_check
        %p1419 = pneg %p144
      $region42: #{patch_expand.1} parent=39 // pred_check_branch
        %1421 = sbr.rel (%p1419) target = $region44
      $region43: #{patch_expand.1} parent=39 // pred_region
        %s1422 = smul.u32 8, %s16
      $region44: #{patch_expand.1} parent=39 // pred_fallthru
        _
    $region40: #{patch_expand.1} parent=5 // pred_fallthru
      _
    %p1423 = scmp.le.s32.totalorder 2, %s11
    // Predicated region
    $region45: #{patch_expand.1} parent=5 // pred_check
      %p1424 = pneg %p1423
    $region46: #{patch_expand.1} parent=5 // pred_check_branch
      %1426 = sbr.rel (%p1424) target = $region48
    $region47: #{patch_expand.1} parent=5 // pred_region
      %s1427 = ssub.s32 %s11, 2
      // Predicated region
      $region49: #{patch_expand.1} parent=47 // pred_check
        %p1428 = pneg %p150
      $region50: #{patch_expand.1} parent=47 // pred_check_branch
        %1430 = sbr.rel (%p1428) target = $region52
      $region51: #{patch_expand.1} parent=47 // pred_region
        %s1431 = smul.u32 8, %s17
        %p1432 = scmp.lt.s32.totalorder %s1431, 15
        %s1433 = scalar_select %p1432, %s1431, 15
        %s1434 = smul.addr %s1433, 2
        %s1435 = smul.addr %s1434, 8
        %s1436 = scalar_lea.vmem %s5, %s1435
      $region52: #{patch_expand.1} parent=47 // pred_fallthru
        _
    $region48: #{patch_expand.1} parent=5 // pred_fallthru
      _
  $region6: #{patch_expand.1} parent=0 // loop_footer
    %s15 = sadd.s32 1, %s11
  $region7: #{patch_expand.1} parent=0 // loop_footer_branch
    %10 = sbr.rel target = $region3
  $region8: #{patch_expand.1} parent=0 // loop_exit
    _

</llo_original>
